<compile_context>
chip_gen: v5e
topology: v5e:2x2
jax: 0.10.0
libtpu: 0.0.40
codegen_flags: <defaults>
</compile_context>

<pallas_src>
import math

import jax
import jax.numpy as jnp
from jax.experimental import pallas as pl
from jax.experimental.pallas import tpu as pltpu


def _round_up(x, m):
    return ((x + m - 1) // m) * m


def _make_embeddings_kernel(n_fields, dims, opr, token_block, out_dtype):
    """Kernel closed over the (static) per-field dims, combine op and token block."""
    col_off = [0]
    for d in dims:
        col_off.append(col_off[-1] + d)

    def kernel(*refs):
        # Ref layout under PrefetchScalarGridSpec(num_scalar_prefetch=n_fields):
        #   refs[0 : n_fields]              per-field id arrays, SMEM (seq_pad,) int32
        #   refs[n_fields : 2 * n_fields]   per-field FULL table, VMEM-resident (V_f, D_f)
        #   refs[2 * n_fields]              output token block, VMEM (T, out_dim)
        idx_refs = refs[:n_fields]
        tab_refs = refs[n_fields:2 * n_fields]
        out_ref = refs[2 * n_fields]

        base = pl.program_id(0) * token_block

        if opr == "cat":
            @pl.loop(0, token_block)
            def _(t):
                for f in range(n_fields):
                    idx = idx_refs[f][base + t]                  # SMEM scalar read
                    row = tab_refs[f][pl.ds(idx, 1), :]          # VMEM dynamic row slice
                    out_ref[pl.ds(t, 1), col_off[f]:col_off[f + 1]] = (
                        row.astype(out_dtype))
        elif opr == "sum":
            @pl.loop(0, token_block)
            def _(t):
                idx0 = idx_refs[0][base + t]
                acc = tab_refs[0][pl.ds(idx0, 1), :].astype(jnp.float32)
                for f in range(1, n_fields):
                    idx = idx_refs[f][base + t]
                    acc = acc + tab_refs[f][pl.ds(idx, 1), :].astype(jnp.float32)
                out_ref[pl.ds(t, 1), :] = acc.astype(out_dtype)
        else:
            raise ValueError(f"unknown operator {opr}")

    return kernel


def embeddings_forward(instance, tables, opr, *, token_block=256):
    """Pallas equivalent of Embeddings.forward (inference).

    instance: dict field -> int   [seq] index array
    tables:   dict field -> float [vocab, dim] embedding table (nn.Embedding.weight)
    opr:      'cat' or 'sum'
    """
    fields = list(tables.keys())
    tabs = [jnp.asarray(tables[f]) for f in fields]
    vocabs = [int(t.shape[0]) for t in tabs]
    dims = [int(t.shape[1]) for t in tabs]
    n_fields = len(fields)
    out_dtype = jnp.result_type(*[t.dtype for t in tabs])

    raw_idx = [jnp.asarray(instance[f]).astype(jnp.int32).reshape(-1) for f in fields]
    lens = {int(a.shape[0]) for a in raw_idx}
    assert len(lens) == 1, "all fields must index the same number of tokens"
    seq = lens.pop()
    assert seq > 0, "empty instance"

    # Token blocking: pad seq up to a multiple of the token block (block is a multiple
    # of 8 sublanes so the output block stores are sublane-dense).
    seq8 = _round_up(seq, 8)
    tb = _round_up(min(int(token_block), seq8), 8)
    seq_pad = _round_up(seq8, tb)

    # Clamp ids to valid rows and pad with id 0 (padding rows are sliced off below).
    idx_arrays = [
        jnp.pad(jnp.clip(a, 0, v - 1), (0, seq_pad - seq))
        for a, v in zip(raw_idx, vocabs)
    ]

    if opr == "cat":
        out_dim = sum(dims)
    elif opr == "sum":
        assert all(d == dims[0] for d in dims), "'sum' requires equal embedding dims"
        out_dim = dims[0]
    else:
        raise ValueError(f"unknown operator {opr}")

    kernel = _make_embeddings_kernel(n_fields, tuple(dims), opr, tb, out_dtype)

    # Resident tables: one full-table block with a constant index_map -> each table is
    # DMA'd from HBM exactly once and stays in VMEM across all token blocks.
    in_specs = [pl.BlockSpec((v, d), lambda i, *_: (0, 0)) for v, d in zip(vocabs, dims)]
    out_spec = pl.BlockSpec((tb, out_dim), lambda i, *_: (i, 0))

    out_itemsize = jnp.dtype(out_dtype).itemsize
    table_bytes = sum(int(t.size) * t.dtype.itemsize for t in tabs)

    # Memory-bound cost hint matching the resident-table strategy: tables read once,
    # output written once, ids read once; flops only for the 'sum' combine.
    cost = pl.CostEstimate(
        flops=(seq_pad * (n_fields - 1) * dims[0]) if opr == "sum" else 0,
        transcendentals=0,
        bytes_accessed=table_bytes + seq_pad * (out_dim * out_itemsize + 4 * n_fields),
    )

    # Explicit VMEM budget: resident tables + double-buffered output block + headroom.
    vmem_needed = table_bytes + 2 * tb * out_dim * out_itemsize
    vmem_limit = int(min(max(4 * vmem_needed, 4 << 20), 48 << 20))

    grid_spec = pltpu.PrefetchScalarGridSpec(
        num_scalar_prefetch=n_fields,
        grid=(seq_pad // tb,),
        in_specs=in_specs,
        out_specs=out_spec,
    )

    out = pl.pallas_call(
        kernel,
        out_shape=jax.ShapeDtypeStruct((seq_pad, out_dim), out_dtype),
        grid_spec=grid_spec,
        compiler_params=pltpu.CompilerParams(
            dimension_semantics=("parallel",),
            vmem_limit_bytes=vmem_limit),
        cost_estimate=cost,
    )(*idx_arrays, *tabs)

    return out[:seq] if seq_pad != seq else out


def _xavier_uniform(key, shape, gain):
    # nn.init.xavier_uniform_ on an Embedding weight (num_embeddings, embedding_dim):
    # bound = gain * sqrt(6 / (fan_in + fan_out)) = gain * sqrt(6 / (rows + cols)).
    fan_sum = shape[0] + shape[1]
    bound = gain * math.sqrt(6.0 / fan_sum)
    return jax.random.uniform(key, shape, jnp.float32, -bound, bound)


if __name__ == "__main__":
    # Deterministic synthetic setup (mirrors Embeddings(opr, dims={...})).
    key = jax.random.PRNGKey(0)
    dims = {"form": (100, 32), "upos": (20, 32)}   # field -> (vocab, embedding_dim)
    gain = math.sqrt(2.0 / (1.0 + 0.1 ** 2))       # calculate_gain('leaky_relu', 0.1)

    keys = jax.random.split(key, 2 * len(dims) + 2)
    tables = {}
    for i, (f, (vocab, dim)) in enumerate(dims.items()):
        tables[f] = _xavier_uniform(keys[2 * i], (vocab, dim), gain)

    ok = True
    # Case 1: small seq (single token block).  Case 2: seq=300 (padding + 2 blocks).
    for case, seq in enumerate((8, 300)):
        instance = {}
        for i, (f, (vocab, dim)) in enumerate(dims.items()):
            ikey = jax.random.fold_in(keys[2 * i + 1], case)
            instance[f] = jax.random.randint(ikey, (seq,), 0, vocab, dtype=jnp.int32)

        out_cat = embeddings_forward(instance, tables, "cat")
        out_sum = embeddings_forward(instance, tables, "sum")
        jax.block_until_ready((out_cat, out_sum))

        # Pure-JAX reference check of forward semantics.
        ref_cat = jnp.concatenate([tables[f][instance[f]] for f in dims], axis=1)
        ref_sum = sum(tables[f][instance[f]] for f in dims)
        ok &= out_cat.shape == (seq, sum(d for _, d in dims.values()))
        ok &= out_sum.shape == (seq, next(iter(dims.values()))[1])
        ok &= bool(jnp.allclose(out_cat, ref_cat, atol=1e-6))
        ok &= bool(jnp.allclose(out_sum, ref_sum, atol=1e-6))

    assert ok
    print("KERNEL_OK")
</pallas_src>

<mosaic_0001>
module attributes {stable_mosaic.version = 11 : i64} {
  func.func @kernel(%arg0: i32, %arg1: memref<8xi32, #tpu.memory_space<smem>>, %arg2: memref<8xi32, #tpu.memory_space<smem>>, %arg3: memref<100x32xf32, #tpu.memory_space<vmem>>, %arg4: memref<20x32xf32, #tpu.memory_space<vmem>>, %arg5: memref<8x64xf32, #tpu.memory_space<vmem>>) attributes {dimension_semantics = [#tpu.dimension_semantics<parallel>], iteration_bounds = array<i64: 1>, scalar_prefetch = 2 : i64, scratch_operands = 0 : i64, tpu.core_type = #tpu.core_type<tc>, window_params = [{pipeline_mode = #tpu.pipeline_mode<synchronous>, transform_indices = @transform_0, window_bounds = array<i64: 100, 32>}, {pipeline_mode = #tpu.pipeline_mode<synchronous>, transform_indices = @transform_1, window_bounds = array<i64: 20, 32>}, {transform_indices = @transform_2, window_bounds = array<i64: 8, 64>}]} {
    %c8_i32 = arith.constant 8 : i32
    %0 = arith.muli %arg0, %c8_i32 : i32
    %c0_i32 = arith.constant 0 : i32
    %c8_i32_0 = arith.constant 8 : i32
    %1 = arith.addi %c0_i32, %c8_i32_0 : i32
    %c1_i32 = arith.constant 1 : i32
    scf.for %arg6 = %c0_i32 to %1 step %c1_i32  : i32 {
      %c1_i32_2 = arith.constant 1 : i32
      %2 = arith.muli %arg6, %c1_i32_2 : i32
      %c0_i32_3 = arith.constant 0 : i32
      %3 = arith.addi %c0_i32_3, %2 : i32
      %4 = arith.addi %0, %3 : i32
      %5 = arith.index_cast %4 : i32 to index
      %6 = memref.load %arg1[%5] : memref<8xi32, #tpu.memory_space<smem>>
      %7 = arith.index_cast %6 : i32 to index
      %c0 = arith.constant 0 : index
      %8 = vector.load %arg3[%7, %c0] : memref<100x32xf32, #tpu.memory_space<vmem>>, vector<1x32xf32>
      %9 = arith.index_cast %3 : i32 to index
      %c0_4 = arith.constant 0 : index
      %10 = vector.load %arg5[%9, %c0_4] : memref<8x64xf32, #tpu.memory_space<vmem>>, vector<1x32xf32>
      tpu.vector_store %arg5[%9, %c0_4], %8 {strides = array<i32>} : memref<8x64xf32, #tpu.memory_space<vmem>>, vector<1x32xf32>,
      %11 = arith.addi %0, %3 : i32
      %12 = arith.index_cast %11 : i32 to index
      %13 = memref.load %arg2[%12] : memref<8xi32, #tpu.memory_space<smem>>
      %14 = arith.index_cast %13 : i32 to index
      %c0_5 = arith.constant 0 : index
      %15 = vector.load %arg4[%14, %c0_5] : memref<20x32xf32, #tpu.memory_space<vmem>>, vector<1x32xf32>
      %16 = arith.index_cast %3 : i32 to index
      %c32 = arith.constant 32 : index
      %17 = vector.load %arg5[%16, %c32] : memref<8x64xf32, #tpu.memory_space<vmem>>, vector<1x32xf32>
      tpu.vector_store %arg5[%16, %c32], %15 {strides = array<i32>} : memref<8x64xf32, #tpu.memory_space<vmem>>, vector<1x32xf32>,
    }
    %c8_i32_1 = arith.constant 8 : i32
    return
  }
  func.func @transform_0(%arg0: i32, %arg1: memref<8xi32, #tpu.memory_space<smem>>, %arg2: memref<8xi32, #tpu.memory_space<smem>>) -> (i32, i32) {
    %c0_i32 = arith.constant 0 : i32
    %c0_i32_0 = arith.constant 0 : i32
    %c0_i32_1 = arith.constant 0 : i32
    return %c0_i32, %c0_i32_0 : i32, i32
  }
  func.func @transform_1(%arg0: i32, %arg1: memref<8xi32, #tpu.memory_space<smem>>, %arg2: memref<8xi32, #tpu.memory_space<smem>>) -> (i32, i32) {
    %c0_i32 = arith.constant 0 : i32
    %c0_i32_0 = arith.constant 0 : i32
    %c0_i32_1 = arith.constant 0 : i32
    return %c0_i32, %c0_i32_0 : i32, i32
  }
  func.func @transform_2(%arg0: i32, %arg1: memref<8xi32, #tpu.memory_space<smem>>, %arg2: memref<8xi32, #tpu.memory_space<smem>>) -> (i32, i32) {
    %c0_i32 = arith.constant 0 : i32
    %c0_i32_0 = arith.constant 0 : i32
    return %arg0, %c0_i32 : i32, i32
  }
}

</mosaic_0001>

<llo_original>
// kernel: tpu_custom_call.1
$region0: #{tpu_custom_call.1}
  #allocation0 [shape = 'u32[]', space=smem, size = 0x4, offset = 0x4, fixed_abs, tag = 'smem constant byte address 0x4 - core index']
  #allocation1 [shape = 'u32[72,128]{1,0:T(1,128)}', space=vmem, size = 0x9000, scoped, tag = 'internal scratch']
  #allocation2 [shape = 's32[1]{0}', space=sflag, size = 0x4, scoped, tag = 'scoped memory for tpu_custom_call.1']
  #allocation3 [shape = 'u8[512]{0}', space=smem, size = 0x200, scoped, tag = 'prefetched SMEM operand 0']
  #allocation4 [shape = 'u8[512]{0}', space=smem, size = 0x200, scoped, tag = 'prefetched SMEM operand 1']
  %s0 = inlined_call_operand.vmem [shape: s32[8], index: 0, kind: input, shape index: {}]
  %s1 = inlined_call_operand.vmem [shape: s32[8], index: 1, kind: input, shape index: {}]
  %s2 = inlined_call_operand.vmem [shape: f32[100,32], index: 2, kind: input, shape index: {}]
  %s3 = inlined_call_operand.vmem [shape: f32[20,32], index: 3, kind: input, shape index: {}]
  %s4 = inlined_call_operand.hbm [shape: f32[8,64], index: 4, kind: output, shape index: {}]
  %s5 = sld [smem:[#allocation0]]
  $region25: #{tpu_custom_call.1} parent=0
    _
  %s7 = ssub.s32 1, %s5
  %s8 = scalar_select 0, %s7, %s5
  %s10 = sshll.u32 %s0, 4
  %s11 = int_to_ptr.vmem [resolvable:$true] %s10
  %13 = dma.vmem_to_smem %s11, 16, [#allocation3], [#allocation2]
  %s15 = sshll.u32 %s1, 4
  %s16 = int_to_ptr.vmem [resolvable:$true] %s15
  %18 = dma.vmem_to_smem %s16, 16, [#allocation4], [#allocation2]
  %20 = dma.done [#allocation2], 32
  %21 = sfence
  $region1: #{tpu_custom_call.1} parent=0
    #allocation5 [shape = 'u8[4096]{0}', space=vmem, size = 0x1000, scoped, tag = 'output window, operand 0, single buffered']
    #allocation6 [shape = 's32[1]{0}', space=sflag, size = 0x4, scoped, tag = 'scoped memory for tpu_custom_call.1']
    %22 = vsyncpa [#allocation6], 0
    // Predicated region
    $region2: #{tpu_custom_call.1} parent=1 // pred_check
      _
    $region3: #{tpu_custom_call.1} parent=1 // pred_check_branch
      %24 = sbr.rel (0) target = $region5
    $region4: #{tpu_custom_call.1} parent=1 // pred_region
      _
    $region5: #{tpu_custom_call.1} parent=1 // pred_fallthru
      _
    // Predicated region
    $region6: #{tpu_custom_call.1} parent=1 // pred_check
      _
    $region7: #{tpu_custom_call.1} parent=1 // pred_check_branch
      %26 = sbr.rel (0) target = $region9
    $region8: #{tpu_custom_call.1} parent=1 // pred_region
      _
    $region9: #{tpu_custom_call.1} parent=1 // pred_fallthru
      _
    %s27 = smul.u32 0, 8
    loop: start=0, step=1, limit=8
    $region10: #{tpu_custom_call.1} parent=1 // loop_pre_header
      _
    $region11: #{tpu_custom_call.1} parent=1 // loop_header
      %s29 = sphi 0, %s33
      %p30 = scmp.ge.s32.totalorder %s29, 8
    $region12: #{tpu_custom_call.1} parent=1 // loop_header_branch
      %32 = sbr.rel (%p30) target = $region16
    $region13: #{tpu_custom_call.1} parent=1 // loop_body
      %s34 = sadd.s32 %s27, %s29
      %s35 = sld [smem:[#allocation3 + %s34]]
      %s36 = scalar_lea.vmem %s2, %s35
      %v37 = vld [vmem:[%s36] sm:$0x1]
      %s38 = scalar_lea.vmem [#allocation5], %s29
      %vm39 = vcmask 253952
      %40 = vst.msk [vmem:[%s38] sm:$0x1] %vm39, %v37
      %s41 = sld [smem:[#allocation4 + %s34]]
      %s42 = scalar_lea.vmem %s3, %s41
      %v43 = vld [vmem:[%s42] sm:$0x1]
      %45 = vrot.lane.b32.xlu0 %v43, 32
      %v46 = vpop.permute.xlu0 %45
      %vm48 = vcmask 516352
      %49 = vst.msk [vmem:[%s38] sm:$0x1] %vm48, %v46
    $region14: #{tpu_custom_call.1} parent=1 // loop_footer
      %s33 = sadd.s32 1, %s29
    $region15: #{tpu_custom_call.1} parent=1 // loop_footer_branch
      %28 = sbr.rel target = $region11
    $region16: #{tpu_custom_call.1} parent=1 // loop_exit
      _
    // Predicated region
    $region17: #{tpu_custom_call.1} parent=1 // pred_check
      _
    $region18: #{tpu_custom_call.1} parent=1 // pred_check_branch
      %51 = sbr.rel (0) target = $region20
    $region19: #{tpu_custom_call.1} parent=1 // pred_region
      %53 = vsyncadd [#allocation6], 0
      %s55 = sshll.u32 [#allocation5], 4
      %s56 = int_to_ptr.vmem [resolvable:$true] %s55
      %s57 = sshll.u32 %s4, 4
      %s58 = int_to_ptr.hbm [resolvable:$true] %s57
      %60 = dma.vmem_to_hbm [thread:$0]  %s56, 128, %s58, [#allocation6]
    $region20: #{tpu_custom_call.1} parent=1 // pred_fallthru
      _
    // Predicated region
    $region21: #{tpu_custom_call.1} parent=1 // pred_check
      _
    $region22: #{tpu_custom_call.1} parent=1 // pred_check_branch
      %62 = sbr.rel (0) target = $region24
    $region23: #{tpu_custom_call.1} parent=1 // pred_region
      %64 = dma.done [#allocation6], 128
    $region24: #{tpu_custom_call.1} parent=1 // pred_fallthru
      _
    %65 = vsyncpa [#allocation6], 1

</llo_original>
